<compile_context>
chip_gen: v5e
topology: v5e:2x2
jax: 0.10.0
libtpu: 0.0.40
codegen_flags: <defaults>
</compile_context>

<pallas_src>
import jax
import jax.numpy as jnp
from jax.experimental import pallas as pl
from jax.experimental.pallas import tpu as pltpu

IN_FEATURES = 11
HIDDEN = 8
OUT_FEATURES = 4


def mlp_kernel(xT_ref, w1T_ref, b1_ref, w2T_ref, b2_ref, oT_ref):
    # xT_ref: (11, TB), w1T_ref: (8, 11), b1_ref: (8, 1),
    # w2T_ref: (4, 8),  b2_ref: (4, 1),  oT_ref: (4, TB)
    xT = xT_ref[...]
    h = jnp.dot(
        w1T_ref[...], xT,
        preferred_element_type=jnp.float32,
        precision=jax.lax.Precision.HIGHEST,
    ) + b1_ref[...]
    h = jnp.maximum(h, 0.0)  # ReLU
    o = jnp.dot(
        w2T_ref[...], h,
        preferred_element_type=jnp.float32,
        precision=jax.lax.Precision.HIGHEST,
    ) + b2_ref[...]
    oT_ref[...] = o.astype(oT_ref.dtype)


def _round_up(n, m):
    return ((n + m - 1) // m) * m


def _pick_tile(batch, tb):
    """Pick a lane-aligned batch tile.

    Large tiles amortize the ~0.35 us per-grid-step overhead; but keep >=2
    (ideally >=4) grid steps when the batch allows so dimension_semantics=
    ("parallel",) can shard across TensorCores (v7x has 2 TCs/chip).
    """
    lanes = _round_up(batch, 128)
    if lanes <= 128:
        return 128
    target_steps = 4 if lanes >= 4 * 1024 else 2
    tile = min(tb, _round_up(pl.cdiv(lanes, target_steps), 128))
    return max(tile, 128)


def _cnn_forward(x, params, *, tb=65536):
    """x: (B, 1, 11) float32 -> (B, 4). Matches CNN.forward."""
    w1, b1, w2, b2 = params
    x2d = x.reshape(x.shape[0], -1)  # torch.flatten(x, 1)
    B = x2d.shape[0]

    TB = _pick_tile(B, tb)
    B_pad = _round_up(B, TB)
    grid = (B_pad // TB,)

    # Layout plumbing: batch on the lane axis; tiny weights transposed once.
    # Under jit (see cnn_forward below) + allow_input_fusion these extra
    # passes can fuse into the pallas input where XLA supports it.
    xT = jnp.pad(x2d.T, ((0, 0), (0, B_pad - B)))      # (11, B_pad)
    w1T = w1.T                                         # (8, 11)
    w2T = w2.T                                         # (4, 8)
    b1c = b1.reshape(HIDDEN, 1)                        # (8, 1)
    b2c = b2.reshape(OUT_FEATURES, 1)                  # (4, 1)

    def resident(shape):
        # Weight/bias blocks: same block every grid step -> stay in VMEM.
        return pl.BlockSpec(shape, lambda i: (0, 0))

    # Double-buffered x + o tiles (the only per-step traffic) + slack for the
    # tiny resident weights / internal scratch.
    vmem_limit = min(
        2 * (IN_FEATURES + OUT_FEATURES) * TB * 4 + (8 << 20),
        64 << 20,
    )
    cost = pl.CostEstimate(
        flops=2 * B_pad * (IN_FEATURES * HIDDEN + HIDDEN * OUT_FEATURES),
        transcendentals=0,
        bytes_accessed=4 * (
            B_pad * (IN_FEATURES + OUT_FEATURES)
            + IN_FEATURES * HIDDEN + HIDDEN
            + HIDDEN * OUT_FEATURES + OUT_FEATURES
        ),
    )

    oT = pl.pallas_call(
        mlp_kernel,
        out_shape=jax.ShapeDtypeStruct((OUT_FEATURES, B_pad), jnp.float32),
        grid=grid,
        in_specs=[
            pl.BlockSpec((IN_FEATURES, TB), lambda i: (0, i)),  # x^T batch tile
            resident((HIDDEN, IN_FEATURES)),                    # W1^T
            resident((HIDDEN, 1)),                              # b1
            resident((OUT_FEATURES, HIDDEN)),                   # W2^T
            resident((OUT_FEATURES, 1)),                        # b2
        ],
        out_specs=pl.BlockSpec((OUT_FEATURES, TB), lambda i: (0, i)),
        compiler_params=pltpu.CompilerParams(
            dimension_semantics=("parallel",),
            vmem_limit_bytes=int(vmem_limit),
            allow_input_fusion=[True, False, False, False, False],
        ),
        cost_estimate=cost,
    )(xT, w1T, b1c, w2T, b2c)

    return oT[:, :B].T  # back to (B, 4); padded columns are sliced off here.


# Single jit over the whole forward so the pad/transpose layout passes live in
# the same program as the pallas call (and can fuse / be elided by XLA).
cnn_forward = jax.jit(_cnn_forward, static_argnames=("tb",))


def init_params(key):
    """Deterministic init mimicking nn.Linear's uniform(-1/sqrt(fan_in), +1/sqrt(fan_in))."""
    k1, k2, k3, k4 = jax.random.split(key, 4)
    bound1 = 1.0 / jnp.sqrt(IN_FEATURES)
    bound2 = 1.0 / jnp.sqrt(HIDDEN)
    w1 = jax.random.uniform(k1, (IN_FEATURES, HIDDEN), jnp.float32, -bound1, bound1)
    b1 = jax.random.uniform(k2, (1, HIDDEN), jnp.float32, -bound1, bound1)
    w2 = jax.random.uniform(k3, (HIDDEN, OUT_FEATURES), jnp.float32, -bound2, bound2)
    b2 = jax.random.uniform(k4, (1, OUT_FEATURES), jnp.float32, -bound2, bound2)
    return w1, b1, w2, b2


def _reference(x, params):
    w1, b1, w2, b2 = params
    x2d = x.reshape(x.shape[0], -1)
    h = jnp.dot(x2d, w1, precision=jax.lax.Precision.HIGHEST) + b1
    h = jnp.maximum(h, 0.0)
    return jnp.dot(h, w2, precision=jax.lax.Precision.HIGHEST) + b2


if __name__ == "__main__":
    key = jax.random.PRNGKey(0)
    kx1, kx2, kp = jax.random.split(key, 3)
    params = init_params(kp)

    # Small-shape check (B=2, single 128-lane tile, grid=(1,)).
    x_small = jax.random.normal(kx1, (2, 1, IN_FEATURES), dtype=jnp.float32)
    out_small = cnn_forward(x_small, params)
    jax.block_until_ready(out_small)
    assert out_small.shape == (2, OUT_FEATURES)
    assert jnp.allclose(out_small, _reference(x_small, params), atol=1e-5), \
        "mismatch vs reference (B=2)"

    # Multi-tile check exercising the batch grid + padding
    # (B=300, tb=128 -> TB=128, grid=(3,)).
    x_big = jax.random.normal(kx2, (300, 1, IN_FEATURES), dtype=jnp.float32)
    out_big = cnn_forward(x_big, params, tb=128)
    jax.block_until_ready(out_big)
    assert out_big.shape == (300, OUT_FEATURES)
    assert jnp.allclose(out_big, _reference(x_big, params), atol=1e-5), \
        "mismatch vs reference (B=300)"

    # Default-tile-heuristic check (B=600 -> TB=384, grid=(2,), parallel axis).
    x_mid = jax.random.normal(kx2, (600, 1, IN_FEATURES), dtype=jnp.float32)
    out_mid = cnn_forward(x_mid, params)
    jax.block_until_ready(out_mid)
    assert out_mid.shape == (600, OUT_FEATURES)
    assert jnp.allclose(out_mid, _reference(x_mid, params), atol=1e-5), \
        "mismatch vs reference (B=600)"

    print("KERNEL_OK")
</pallas_src>

<mosaic_0001>
module attributes {stable_mosaic.version = 11 : i64} {
  func.func @mlp_kernel(%arg0: i32, %arg1: memref<11x128xf32, #tpu.memory_space<vmem>>, %arg2: memref<8x11xf32, #tpu.memory_space<vmem>>, %arg3: memref<8x1xf32, #tpu.memory_space<vmem>>, %arg4: memref<4x8xf32, #tpu.memory_space<vmem>>, %arg5: memref<4x1xf32, #tpu.memory_space<vmem>>, %arg6: memref<4x128xf32, #tpu.memory_space<vmem>>) attributes {dimension_semantics = [#tpu.dimension_semantics<parallel>], iteration_bounds = array<i64: 1>, scalar_prefetch = 0 : i64, scratch_operands = 0 : i64, tpu.core_type = #tpu.core_type<tc>, window_params = [{transform_indices = @transform_0, window_bounds = array<i64: 11, 128>}, {pipeline_mode = #tpu.pipeline_mode<synchronous>, transform_indices = @transform_1, window_bounds = array<i64: 8, 11>}, {pipeline_mode = #tpu.pipeline_mode<synchronous>, transform_indices = @transform_2, window_bounds = array<i64: 8, 1>}, {pipeline_mode = #tpu.pipeline_mode<synchronous>, transform_indices = @transform_3, window_bounds = array<i64: 4, 8>}, {pipeline_mode = #tpu.pipeline_mode<synchronous>, transform_indices = @transform_4, window_bounds = array<i64: 4, 1>}, {transform_indices = @transform_5, window_bounds = array<i64: 4, 128>}]} {
    %c0 = arith.constant 0 : index
    %c0_0 = arith.constant 0 : index
    %0 = vector.load %arg1[%c0, %c0_0] : memref<11x128xf32, #tpu.memory_space<vmem>>, vector<11x128xf32>
    %c0_1 = arith.constant 0 : index
    %c0_2 = arith.constant 0 : index
    %1 = vector.load %arg2[%c0_1, %c0_2] : memref<8x11xf32, #tpu.memory_space<vmem>>, vector<8x11xf32>
    %cst = arith.constant dense<0.000000e+00> : vector<8x128xf32>
    %2 = tpu.matmul %1, %0, %cst {dimension_numbers = #tpu.dot_dimension_numbers<[1], [0], [0], [1], [0, 0, 1, 1], [], []>, precision = #tpu.contract_precision<fp32>} : vector<8x11xf32>, vector<11x128xf32>, vector<8x128xf32> -> vector<8x128xf32>
    %c0_3 = arith.constant 0 : index
    %c0_4 = arith.constant 0 : index
    %3 = vector.load %arg3[%c0_3, %c0_4] : memref<8x1xf32, #tpu.memory_space<vmem>>, vector<8x1xf32>
    %4 = vector.broadcast %3 : vector<8x1xf32> to vector<8x128xf32>
    %5 = arith.addf %2, %4 : vector<8x128xf32>
    %cst_5 = arith.constant 0.000000e+00 : f32
    %6 = vector.broadcast %cst_5 : f32 to vector<8x128xf32>
    %7 = arith.maximumf %5, %6 : vector<8x128xf32>
    %c0_6 = arith.constant 0 : index
    %c0_7 = arith.constant 0 : index
    %8 = vector.load %arg4[%c0_6, %c0_7] : memref<4x8xf32, #tpu.memory_space<vmem>>, vector<4x8xf32>
    %cst_8 = arith.constant dense<0.000000e+00> : vector<4x128xf32>
    %9 = tpu.matmul %8, %7, %cst_8 {dimension_numbers = #tpu.dot_dimension_numbers<[1], [0], [0], [1], [0, 0, 1, 1], [], []>, precision = #tpu.contract_precision<fp32>} : vector<4x8xf32>, vector<8x128xf32>, vector<4x128xf32> -> vector<4x128xf32>
    %c0_9 = arith.constant 0 : index
    %c0_10 = arith.constant 0 : index
    %10 = vector.load %arg5[%c0_9, %c0_10] : memref<4x1xf32, #tpu.memory_space<vmem>>, vector<4x1xf32>
    %11 = vector.broadcast %10 : vector<4x1xf32> to vector<4x128xf32>
    %12 = arith.addf %9, %11 : vector<4x128xf32>
    %c0_11 = arith.constant 0 : index
    %c0_12 = arith.constant 0 : index
    %13 = vector.load %arg6[%c0_11, %c0_12] : memref<4x128xf32, #tpu.memory_space<vmem>>, vector<4x128xf32>
    tpu.vector_store %arg6[%c0_11, %c0_12], %12 {strides = array<i32>} : memref<4x128xf32, #tpu.memory_space<vmem>>, vector<4x128xf32>,
    return
  }
  func.func @transform_0(%arg0: i32) -> (i32, i32) {
    %c0_i32 = arith.constant 0 : i32
    %c0_i32_0 = arith.constant 0 : i32
    return %c0_i32, %arg0 : i32, i32
  }
  func.func @transform_1(%arg0: i32) -> (i32, i32) {
    %c0_i32 = arith.constant 0 : i32
    %c0_i32_0 = arith.constant 0 : i32
    %c0_i32_1 = arith.constant 0 : i32
    return %c0_i32, %c0_i32_0 : i32, i32
  }
  func.func @transform_2(%arg0: i32) -> (i32, i32) {
    %c0_i32 = arith.constant 0 : i32
    %c0_i32_0 = arith.constant 0 : i32
    %c0_i32_1 = arith.constant 0 : i32
    return %c0_i32, %c0_i32_0 : i32, i32
  }
  func.func @transform_3(%arg0: i32) -> (i32, i32) {
    %c0_i32 = arith.constant 0 : i32
    %c0_i32_0 = arith.constant 0 : i32
    %c0_i32_1 = arith.constant 0 : i32
    return %c0_i32, %c0_i32_0 : i32, i32
  }
  func.func @transform_4(%arg0: i32) -> (i32, i32) {
    %c0_i32 = arith.constant 0 : i32
    %c0_i32_0 = arith.constant 0 : i32
    %c0_i32_1 = arith.constant 0 : i32
    return %c0_i32, %c0_i32_0 : i32, i32
  }
  func.func @transform_5(%arg0: i32) -> (i32, i32) {
    %c0_i32 = arith.constant 0 : i32
    %c0_i32_0 = arith.constant 0 : i32
    return %c0_i32, %arg0 : i32, i32
  }
}

</mosaic_0001>

<llo_original>
// kernel: _cnn_forward.2
$region0: #{_cnn_forward.2}
  #allocation0 [shape = 'u32[]', space=smem, size = 0x4, offset = 0x4, fixed_abs, tag = 'smem constant byte address 0x4 - core index']
  #allocation1 [shape = 'u32[72,128]{1,0:T(1,128)}', space=vmem, size = 0x9000, scoped, tag = 'internal scratch']
  #allocation2 [shape = 'u32[2048]{0}', space=vmem, size = 0x2000, scoped, tag = 'scoped memory for _cnn_forward.2']
  #allocation3 [shape = 'u32[2048]{0}', space=vmem, size = 0x2000, scoped, tag = 'scoped memory for _cnn_forward.2']
  #allocation4 [shape = 'u32[2048]{0}', space=vmem, size = 0x2000, scoped, tag = 'scoped memory for _cnn_forward.2']
  #allocation5 [shape = 'u32[2048]{0}', space=vmem, size = 0x2000, scoped, tag = 'scoped memory for _cnn_forward.2']
  #allocation6 [shape = 'u32[2048]{0}', space=vmem, size = 0x2000, scoped, tag = 'scoped memory for _cnn_forward.2']
  %s0 = inlined_call_operand.vmem [shape: f32[8,11], index: 0, kind: input, shape index: {}]
  %s1 = inlined_call_operand.vmem [shape: f32[8,1], index: 1, kind: input, shape index: {}]
  %s2 = inlined_call_operand.vmem [shape: f32[4,8], index: 2, kind: input, shape index: {}]
  %s3 = inlined_call_operand.vmem [shape: f32[4,1], index: 3, kind: input, shape index: {}]
  %s4 = inlined_call_operand.vmem [shape: f32[11,2], index: 4, kind: input, shape index: {}]
  %s5 = inlined_call_operand.<no memory space> [shape: f32[], index: 5, kind: input, shape index: {}]
  %s6 = inlined_call_operand.vmem [shape: f32[4,128], index: 6, kind: output, shape index: {}]
  %s7 = sld [smem:[#allocation0]]
  $region30: #{_cnn_forward.2} parent=0
    _
  %s9 = ssub.s32 1, %s7
  %s10 = scalar_select 0, %s9, %s7
  %v11 = vstv %s5
  $region1: #{_cnn_forward.2} parent=0
    #allocation7 [shape = 'u8[8192]{0}', space=vmem, size = 0x2000, dematerialized = true, scoped, tag = 'FusionAdapter Buffer %fusion.1 = f32[11,128]{1,0:T(8,128)} fusion(%param_4.1, %param_5), kind=kLoop, calls=%fused_computation.1.clone, metadata={op_name="jit(_cnn_forward)/jit(_pad)/pad" stack_frame_id=9}']
    // Predicated region
    $region2: #{_cnn_forward.2} parent=1 // pred_check
      _
    $region3: #{_cnn_forward.2} parent=1 // pred_check_branch
      %13 = sbr.rel (0) target = $region5
    $region4: #{_cnn_forward.2} parent=1 // pred_region
      _
    $region5: #{_cnn_forward.2} parent=1 // pred_fallthru
      _
    // Predicated region
    $region6: #{_cnn_forward.2} parent=1 // pred_check
      _
    $region7: #{_cnn_forward.2} parent=1 // pred_check_branch
      %15 = sbr.rel (0) target = $region9
    $region8: #{_cnn_forward.2} parent=1 // pred_region
      _
    $region9: #{_cnn_forward.2} parent=1 // pred_fallthru
      _
    // Predicated region
    $region10: #{_cnn_forward.2} parent=1 // pred_check
      _
    $region11: #{_cnn_forward.2} parent=1 // pred_check_branch
      %17 = sbr.rel (0) target = $region13
    $region12: #{_cnn_forward.2} parent=1 // pred_region
      _
    $region13: #{_cnn_forward.2} parent=1 // pred_fallthru
      _
    // Predicated region
    $region14: #{_cnn_forward.2} parent=1 // pred_check
      _
    $region15: #{_cnn_forward.2} parent=1 // pred_check_branch
      %19 = sbr.rel (0) target = $region17
    $region16: #{_cnn_forward.2} parent=1 // pred_region
      _
    $region17: #{_cnn_forward.2} parent=1 // pred_fallthru
      _
    // Predicated region
    $region18: #{_cnn_forward.2} parent=1 // pred_check
      _
    $region19: #{_cnn_forward.2} parent=1 // pred_check_branch
      %21 = sbr.rel (0) target = $region21
    $region20: #{_cnn_forward.2} parent=1 // pred_region
      _
    $region21: #{_cnn_forward.2} parent=1 // pred_fallthru
      _
    %v22 = vld [vmem:[%s4] sm:$0xff]
    %v23 = vlaneseq
    %v24 = vshrl.u32 %v23, 7
    %vm26 = vcmp.lt.s32.totalorder %v24, 11
    %v27 = vsel %vm26, %v22, %v11
    %v28 = vlaneseq
    %v29 = vand.u32 %v28, 127
    %vm31 = vcmp.lt.s32.totalorder %v29, 2
    %v32 = vsel %vm31, %v27, %v11
    %s34 = ssub.s32 256, 1
    %35 = vst [vmem:[#allocation7] sm:%s34] %v32
    %s36 = scalar_lea.vmem %s4, 8
    %v37 = vld [vmem:[%s36] sm:$0xff]
    %v38 = vlaneseq
    %v39 = vshrl.u32 %v38, 7
    %v40 = vadd.s32 %v39, 8
    %vm41 = vcmp.lt.s32.totalorder %v40, 11
    %v42 = vsel %vm41, %v37, %v11
    %v43 = vlaneseq
    %v44 = vand.u32 %v43, 127
    %vm46 = vcmp.lt.s32.totalorder %v44, 2
    %v47 = vsel %vm46, %v42, %v11
    %s48 = scalar_lea.vmem [#allocation7], 8
    %s50 = ssub.s32 256, 1
    %51 = vst [vmem:[%s48] sm:%s50] %v47
    %v52 = vld [vmem:[#allocation7] sm:$0xff]
    %v53 = vld [vmem:[#allocation7 + $0x8] sm:$0x7]
    %v54 = vld [vmem:[%s0] sm:$0xff]
    %v55 = vld [vmem:[%s1] sm:$0xff]
    %57 = vset.pattern.permute.xlu0 0
    %58 = vperm.xlu0 %57, %v55
    %v59 = vpop.permute.xlu0 %58
    %vm61 = vcmask 89088
    %v63 = vsel %vm61, %v54, 0
    %vm65 = vcmask 1042432
    %v67 = vsel %vm65, %v53, 0
    %69 = vmatpush.msra.mxu0 0.0
    %70 = vmatpush.msra.mxu0 0.0
    %71 = vmatpush.msra.mxu0 0.0
    %72 = vmatpush.msra.mxu0 0.0
    %73 = vmatpush.msra.mxu0 0.0
    %74 = vmatpush.msra.mxu0 0.0
    %75 = vmatpush.msra.mxu0 0.0
    %76 = vmatpush.msra.mxu0 0.0
    %77 = vmatpush.msra.mxu0 0.0
    %78 = vmatpush.msra.mxu0 0.0
    %79 = vmatpush.msra.mxu0 0.0
    %80 = vmatpush.msra.mxu0 0.0
    %81 = vmatpush.msra.mxu0 0.0
    %82 = vmatpush.msra.mxu0 0.0
    %v83 = vand.u32 %v67, 4294901760
    %84 = vmatpush.msra.mxu0 %v83
    %v85 = vand.u32 %v52, 4294901760
    %86 = vmatpush.msra.mxu0 %v85
    %v87 = vand.u32 %v63, 4294901760
    %v88 = vsub.f32 %v63, %v87
    %v89 = vand.u32 %v88, 4294901760
    %v90 = vsub.f32 %v88, %v89
    %v91 = vand.u32 %v90, 4294901760
    %92 = vmatmul.f32.gmra.mxu0 %v91
    %v93 = vpop.f32.mrf.mxu0
    %v94 = vadd.f32 %v59, %v93
    %95 = vdwg.mxu0
    %96 = vmatpush.msra.mxu0 0.0
    %97 = vmatpush.msra.mxu0 0.0
    %98 = vmatpush.msra.mxu0 0.0
    %99 = vmatpush.msra.mxu0 0.0
    %100 = vmatpush.msra.mxu0 0.0
    %101 = vmatpush.msra.mxu0 0.0
    %102 = vmatpush.msra.mxu0 0.0
    %103 = vmatpush.msra.mxu0 0.0
    %104 = vmatpush.msra.mxu0 0.0
    %105 = vmatpush.msra.mxu0 0.0
    %106 = vmatpush.msra.mxu0 0.0
    %107 = vmatpush.msra.mxu0 0.0
    %108 = vmatpush.msra.mxu0 0.0
    %109 = vmatpush.msra.mxu0 0.0
    %v110 = vand.u32 %v67, 4294901760
    %v111 = vsub.f32 %v67, %v110
    %v112 = vand.u32 %v111, 4294901760
    %v113 = vsub.f32 %v111, %v112
    %v114 = vand.u32 %v113, 4294901760
    %115 = vmatpush.msra.mxu0 %v114
    %v116 = vand.u32 %v52, 4294901760
    %v117 = vsub.f32 %v52, %v116
    %v118 = vand.u32 %v117, 4294901760
    %v119 = vsub.f32 %v117, %v118
    %v120 = vand.u32 %v119, 4294901760
    %121 = vmatpush.msra.mxu0 %v120
    %v122 = vand.u32 %v63, 4294901760
    %123 = vmatmul.f32.gmra.mxu0 %v122
    %v124 = vpop.f32.mrf.mxu0
    %v125 = vadd.f32 %v94, %v124
    %126 = vdwg.mxu0
    %127 = vmatpush.msra.mxu0 0.0
    %128 = vmatpush.msra.mxu0 0.0
    %129 = vmatpush.msra.mxu0 0.0
    %130 = vmatpush.msra.mxu0 0.0
    %131 = vmatpush.msra.mxu0 0.0
    %132 = vmatpush.msra.mxu0 0.0
    %133 = vmatpush.msra.mxu0 0.0
    %134 = vmatpush.msra.mxu0 0.0
    %135 = vmatpush.msra.mxu0 0.0
    %136 = vmatpush.msra.mxu0 0.0
    %137 = vmatpush.msra.mxu0 0.0
    %138 = vmatpush.msra.mxu0 0.0
    %139 = vmatpush.msra.mxu0 0.0
    %140 = vmatpush.msra.mxu0 0.0
    %v141 = vand.u32 %v67, 4294901760
    %v142 = vsub.f32 %v67, %v141
    %143 = vmatpush.msra.mxu0 %v142
    %v144 = vand.u32 %v52, 4294901760
    %v145 = vsub.f32 %v52, %v144
    %146 = vmatpush.msra.mxu0 %v145
    %v147 = vand.u32 %v63, 4294901760
    %v148 = vsub.f32 %v63, %v147
    %149 = vmatmul.f32.gmra.mxu0 %v148
    %v150 = vpop.f32.mrf.mxu0
    %v151 = vadd.f32 %v125, %v150
    %152 = vdwg.mxu0
    %153 = vmatpush.msra.mxu0 0.0
    %154 = vmatpush.msra.mxu0 0.0
    %155 = vmatpush.msra.mxu0 0.0
    %156 = vmatpush.msra.mxu0 0.0
    %157 = vmatpush.msra.mxu0 0.0
    %158 = vmatpush.msra.mxu0 0.0
    %159 = vmatpush.msra.mxu0 0.0
    %160 = vmatpush.msra.mxu0 0.0
    %161 = vmatpush.msra.mxu0 0.0
    %162 = vmatpush.msra.mxu0 0.0
    %163 = vmatpush.msra.mxu0 0.0
    %164 = vmatpush.msra.mxu0 0.0
    %165 = vmatpush.msra.mxu0 0.0
    %166 = vmatpush.msra.mxu0 0.0
    %v167 = vand.u32 %v67, 4294901760
    %168 = vmatpush.msra.mxu0 %v167
    %v169 = vand.u32 %v52, 4294901760
    %170 = vmatpush.msra.mxu0 %v169
    %v171 = vand.u32 %v63, 4294901760
    %v172 = vsub.f32 %v63, %v171
    %v173 = vand.u32 %v172, 4294901760
    %174 = vmatmul.f32.gmra.mxu0 %v173
    %v175 = vpop.f32.mrf.mxu0
    %v176 = vadd.f32 %v151, %v175
    %177 = vdwg.mxu0
    %178 = vmatpush.msra.mxu0 0.0
    %179 = vmatpush.msra.mxu0 0.0
    %180 = vmatpush.msra.mxu0 0.0
    %181 = vmatpush.msra.mxu0 0.0
    %182 = vmatpush.msra.mxu0 0.0
    %183 = vmatpush.msra.mxu0 0.0
    %184 = vmatpush.msra.mxu0 0.0
    %185 = vmatpush.msra.mxu0 0.0
    %186 = vmatpush.msra.mxu0 0.0
    %187 = vmatpush.msra.mxu0 0.0
    %188 = vmatpush.msra.mxu0 0.0
    %189 = vmatpush.msra.mxu0 0.0
    %190 = vmatpush.msra.mxu0 0.0
    %191 = vmatpush.msra.mxu0 0.0
    %v192 = vand.u32 %v67, 4294901760
    %v193 = vsub.f32 %v67, %v192
    %v194 = vand.u32 %v193, 4294901760
    %195 = vmatpush.msra.mxu0 %v194
    %v196 = vand.u32 %v52, 4294901760
    %v197 = vsub.f32 %v52, %v196
    %v198 = vand.u32 %v197, 4294901760
    %199 = vmatpush.msra.mxu0 %v198
    %v200 = vand.u32 %v63, 4294901760
    %201 = vmatmul.f32.gmra.mxu0 %v200
    %v202 = vpop.f32.mrf.mxu0
    %v203 = vadd.f32 %v176, %v202
    %204 = vdwg.mxu0
    %205 = vmatpush.msra.mxu0 0.0
    %206 = vmatpush.msra.mxu0 0.0
    %207 = vmatpush.msra.mxu0 0.0
    %208 = vmatpush.msra.mxu0 0.0
    %209 = vmatpush.msra.mxu0 0.0
    %210 = vmatpush.msra.mxu0 0.0
    %211 = vmatpush.msra.mxu0 0.0
    %212 = vmatpush.msra.mxu0 0.0
    %213 = vmatpush.msra.mxu0 0.0
    %214 = vmatpush.msra.mxu0 0.0
    %215 = vmatpush.msra.mxu0 0.0
    %216 = vmatpush.msra.mxu0 0.0
    %217 = vmatpush.msra.mxu0 0.0
    %218 = vmatpush.msra.mxu0 0.0
    %v219 = vand.u32 %v67, 4294901760
    %220 = vmatpush.msra.mxu0 %v219
    %v221 = vand.u32 %v52, 4294901760
    %222 = vmatpush.msra.mxu0 %v221
    %v223 = vand.u32 %v63, 4294901760
    %224 = vmatmul.f32.gmra.mxu0 %v223
    %v225 = vpop.f32.mrf.mxu0
    %v226 = vadd.f32 %v203, %v225
    %227 = vdwg.mxu0
    %v228 = vmax.f32 %v226, 0.0
    %v229 = vld [vmem:[%s2] sm:$0xf]
    %v230 = vld [vmem:[%s3] sm:$0xf]
    %232 = vset.pattern.permute.xlu0 0
    %233 = vperm.xlu0 %232, %v230
    %v234 = vpop.permute.xlu0 %233
    %vm236 = vcmask 64512
    %v238 = vsel %vm236, %v229, 0
    %240 = vmatpush.msra.mxu0 0.0
    %241 = vmatpush.msra.mxu0 0.0
    %242 = vmatpush.msra.mxu0 0.0
    %243 = vmatpush.msra.mxu0 0.0
    %244 = vmatpush.msra.mxu0 0.0
    %245 = vmatpush.msra.mxu0 0.0
    %246 = vmatpush.msra.mxu0 0.0
    %247 = vmatpush.msra.mxu0 0.0
    %248 = vmatpush.msra.mxu0 0.0
    %249 = vmatpush.msra.mxu0 0.0
    %250 = vmatpush.msra.mxu0 0.0
    %251 = vmatpush.msra.mxu0 0.0
    %252 = vmatpush.msra.mxu0 0.0
    %253 = vmatpush.msra.mxu0 0.0
    %254 = vmatpush.msra.mxu0 0.0
    %v255 = vand.u32 %v228, 4294901760
    %256 = vmatpush.msra.mxu0 %v255
    %v257 = vand.u32 %v238, 4294901760
    %v258 = vsub.f32 %v238, %v257
    %v259 = vand.u32 %v258, 4294901760
    %v260 = vsub.f32 %v258, %v259
    %v261 = vand.u32 %v260, 4294901760
    %262 = vmatmul.f32.gmra.mxu0 %v261
    %v263 = vpop.f32.mrf.mxu0
    %v264 = vadd.f32 %v234, %v263
    %265 = vdwg.mxu0
    %266 = vmatpush.msra.mxu0 0.0
    %267 = vmatpush.msra.mxu0 0.0
    %268 = vmatpush.msra.mxu0 0.0
    %269 = vmatpush.msra.mxu0 0.0
    %270 = vmatpush.msra.mxu0 0.0
    %271 = vmatpush.msra.mxu0 0.0
    %272 = vmatpush.msra.mxu0 0.0
    %273 = vmatpush.msra.mxu0 0.0
    %274 = vmatpush.msra.mxu0 0.0
    %275 = vmatpush.msra.mxu0 0.0
    %276 = vmatpush.msra.mxu0 0.0
    %277 = vmatpush.msra.mxu0 0.0
    %278 = vmatpush.msra.mxu0 0.0
    %279 = vmatpush.msra.mxu0 0.0
    %280 = vmatpush.msra.mxu0 0.0
    %v281 = vand.u32 %v228, 4294901760
    %v282 = vsub.f32 %v228, %v281
    %v283 = vand.u32 %v282, 4294901760
    %v284 = vsub.f32 %v282, %v283
    %v285 = vand.u32 %v284, 4294901760
    %286 = vmatpush.msra.mxu0 %v285
    %v287 = vand.u32 %v238, 4294901760
    %288 = vmatmul.f32.gmra.mxu0 %v287
    %v289 = vpop.f32.mrf.mxu0
    %v290 = vadd.f32 %v264, %v289
    %291 = vdwg.mxu0
    %292 = vmatpush.msra.mxu0 0.0
    %293 = vmatpush.msra.mxu0 0.0
    %294 = vmatpush.msra.mxu0 0.0
    %295 = vmatpush.msra.mxu0 0.0
    %296 = vmatpush.msra.mxu0 0.0
    %297 = vmatpush.msra.mxu0 0.0
    %298 = vmatpush.msra.mxu0 0.0
    %299 = vmatpush.msra.mxu0 0.0
    %300 = vmatpush.msra.mxu0 0.0
    %301 = vmatpush.msra.mxu0 0.0
    %302 = vmatpush.msra.mxu0 0.0
    %303 = vmatpush.msra.mxu0 0.0
    %304 = vmatpush.msra.mxu0 0.0
    %305 = vmatpush.msra.mxu0 0.0
    %306 = vmatpush.msra.mxu0 0.0
    %v307 = vand.u32 %v228, 4294901760
    %v308 = vsub.f32 %v228, %v307
    %309 = vmatpush.msra.mxu0 %v308
    %v310 = vand.u32 %v238, 4294901760
    %v311 = vsub.f32 %v238, %v310
    %312 = vmatmul.f32.gmra.mxu0 %v311
    %v313 = vpop.f32.mrf.mxu0
    %v314 = vadd.f32 %v290, %v313
    %315 = vdwg.mxu0
    %316 = vmatpush.msra.mxu0 0.0
    %317 = vmatpush.msra.mxu0 0.0
    %318 = vmatpush.msra.mxu0 0.0
    %319 = vmatpush.msra.mxu0 0.0
    %320 = vmatpush.msra.mxu0 0.0
    %321 = vmatpush.msra.mxu0 0.0
    %322 = vmatpush.msra.mxu0 0.0
    %323 = vmatpush.msra.mxu0 0.0
    %324 = vmatpush.msra.mxu0 0.0
    %325 = vmatpush.msra.mxu0 0.0
    %326 = vmatpush.msra.mxu0 0.0
    %327 = vmatpush.msra.mxu0 0.0
    %328 = vmatpush.msra.mxu0 0.0
    %329 = vmatpush.msra.mxu0 0.0
    %330 = vmatpush.msra.mxu0 0.0
    %v331 = vand.u32 %v228, 4294901760
    %332 = vmatpush.msra.mxu0 %v331
    %v333 = vand.u32 %v238, 4294901760
    %v334 = vsub.f32 %v238, %v333
    %v335 = vand.u32 %v334, 4294901760
    %336 = vmatmul.f32.gmra.mxu0 %v335
    %v337 = vpop.f32.mrf.mxu0
    %v338 = vadd.f32 %v314, %v337
    %339 = vdwg.mxu0
    %340 = vmatpush.msra.mxu0 0.0
    %341 = vmatpush.msra.mxu0 0.0
    %342 = vmatpush.msra.mxu0 0.0
    %343 = vmatpush.msra.mxu0 0.0
    %344 = vmatpush.msra.mxu0 0.0
    %345 = vmatpush.msra.mxu0 0.0
    %346 = vmatpush.msra.mxu0 0.0
    %347 = vmatpush.msra.mxu0 0.0
    %348 = vmatpush.msra.mxu0 0.0
    %349 = vmatpush.msra.mxu0 0.0
    %350 = vmatpush.msra.mxu0 0.0
    %351 = vmatpush.msra.mxu0 0.0
    %352 = vmatpush.msra.mxu0 0.0
    %353 = vmatpush.msra.mxu0 0.0
    %354 = vmatpush.msra.mxu0 0.0
    %v355 = vand.u32 %v228, 4294901760
    %v356 = vsub.f32 %v228, %v355
    %v357 = vand.u32 %v356, 4294901760
    %358 = vmatpush.msra.mxu0 %v357
    %v359 = vand.u32 %v238, 4294901760
    %360 = vmatmul.f32.gmra.mxu0 %v359
    %v361 = vpop.f32.mrf.mxu0
    %v362 = vadd.f32 %v338, %v361
    %363 = vdwg.mxu0
    %364 = vmatpush.msra.mxu0 0.0
    %365 = vmatpush.msra.mxu0 0.0
    %366 = vmatpush.msra.mxu0 0.0
    %367 = vmatpush.msra.mxu0 0.0
    %368 = vmatpush.msra.mxu0 0.0
    %369 = vmatpush.msra.mxu0 0.0
    %370 = vmatpush.msra.mxu0 0.0
    %371 = vmatpush.msra.mxu0 0.0
    %372 = vmatpush.msra.mxu0 0.0
    %373 = vmatpush.msra.mxu0 0.0
    %374 = vmatpush.msra.mxu0 0.0
    %375 = vmatpush.msra.mxu0 0.0
    %376 = vmatpush.msra.mxu0 0.0
    %377 = vmatpush.msra.mxu0 0.0
    %378 = vmatpush.msra.mxu0 0.0
    %v379 = vand.u32 %v228, 4294901760
    %380 = vmatpush.msra.mxu0 %v379
    %v381 = vand.u32 %v238, 4294901760
    %382 = vmatmul.f32.gmra.mxu0 %v381
    %v383 = vpop.f32.mrf.mxu0
    %v384 = vadd.f32 %v362, %v383
    %385 = vdwg.mxu0
    %386 = vst [vmem:[%s6] sm:$0xf] %v384
    // Predicated region
    $region22: #{_cnn_forward.2} parent=1 // pred_check
      _
    $region23: #{_cnn_forward.2} parent=1 // pred_check_branch
      %388 = sbr.rel (0) target = $region25
    $region24: #{_cnn_forward.2} parent=1 // pred_region
      _
    $region25: #{_cnn_forward.2} parent=1 // pred_fallthru
      _
    // Predicated region
    $region26: #{_cnn_forward.2} parent=1 // pred_check
      _
    $region27: #{_cnn_forward.2} parent=1 // pred_check_branch
      %390 = sbr.rel (0) target = $region29
    $region28: #{_cnn_forward.2} parent=1 // pred_region
      _
    $region29: #{_cnn_forward.2} parent=1 // pred_fallthru
      _

</llo_original>
